<compile_context>
chip_gen: v5e
topology: v5e:2x2
jax: 0.10.0
libtpu: 0.0.40
codegen_flags: <defaults>
</compile_context>

<pallas_src>
import functools

import jax
import jax.numpy as jnp
from jax import lax
from jax.experimental import pallas as pl
from jax.experimental.pallas import tpu as pltpu


def _elu(x):
    # ELU(alpha=1): x if x>0 else exp(x)-1  (arg clamped so unused branch stays finite)
    return jnp.where(x > 0, x, jnp.exp(jnp.minimum(x, 0.0)) - 1.0)


# ---------------------------------------------------------------------------
# Fused kernel: one grid step per batch element.
# Layout: channels on sublanes, low-res positions l on lanes.
#   hcat = W1cat @ x + b1cat                (conv1+BN1 stacked with identity conv+BNi)
#   h1   = ELU(hcat[:C]);  idn = hcat[C:]
#   conv2 (k=3, pad=1) on the x2-upsampled + trimmed signal, both parities at once:
#     even[l] = W20@h1[l-1] + W21@h1[l] + W22@(h1[l] masked at l=L-1)   (trim)
#     odd [l] = (W20+W21)@h1[l] + W22@h1[l+1]                            (l=L-1 dropped)
#   conv3+BN3 on each parity with the same (C4, C) weight; + idn; ELU.
#   Output block (C4, 2L) = [even | odd] along lanes (lane-dense, unmasked stores).
# ---------------------------------------------------------------------------
def fused_kernel(x_ref, w1_ref, b1_ref, w2_ref, b2_ref, w3_ref, b3_ref, out_ref,
                 *, C, C4, L):
    f32 = jnp.float32
    x = x_ref[...]                                                    # (Cin, L) bf16

    # conv1+BN1 and identity 1x1+BNi: one MXU pass on stacked output channels.
    hcat = jnp.dot(w1_ref[...], x, preferred_element_type=f32) + b1_ref[...]
    h1 = _elu(hcat[:C, :])                                            # (C,  L) main path
    idn = hcat[C:, :]                                                 # (C4, L) identity path

    # Boundary masks from an iota (replaces the old dense shift matrices).
    lane = lax.broadcasted_iota(jnp.int32, (1, L), 1)
    not_first = (lane > 0).astype(f32)
    not_last = (lane < L - 1).astype(f32)

    # Neighbour columns via XLU lane rolls + masking (conv zero-padding / trim).
    h_prev = pltpu.roll(h1, shift=1, axis=1) * not_first              # h1[l-1], 0 at l==0
    h_next = pltpu.roll(h1, shift=L - 1, axis=1) * not_last           # h1[l+1], 0 at l==L-1
    h_last = h1 * not_last                                            # h1[l],   0 at l==L-1 (trim)

    h1b = h1.astype(jnp.bfloat16)
    hpb = h_prev.astype(jnp.bfloat16)
    hnb = h_next.astype(jnp.bfloat16)
    hlb = h_last.astype(jnp.bfloat16)

    # conv2+BN2 (both parities) from shared taps -- no structural-zero blocks.
    even = (jnp.dot(w2_ref[0], hpb, preferred_element_type=f32)
            + jnp.dot(w2_ref[1], h1b, preferred_element_type=f32)
            + jnp.dot(w2_ref[2], hlb, preferred_element_type=f32)) + b2_ref[...]
    odd = (jnp.dot(w2_ref[3], h1b, preferred_element_type=f32)        # w2[3] = tap0+tap1
           + jnp.dot(w2_ref[2], hnb, preferred_element_type=f32)) + b2_ref[...]
    y_even = _elu(even).astype(jnp.bfloat16)                          # (C, L)
    y_odd = _elu(odd).astype(jnp.bfloat16)                            # (C, L)

    # conv3+BN3 (same weight for both parities), residual add, ELU.
    z_even = jnp.dot(w3_ref[...], y_even, preferred_element_type=f32) + b3_ref[...]
    z_odd = jnp.dot(w3_ref[...], y_odd, preferred_element_type=f32) + b3_ref[...]
    out_ref[:, :L] = _elu(z_even + idn)                               # even positions
    out_ref[:, L:] = _elu(z_odd + idn)                                # odd positions


def fused_forward(x_bcl, params):
    B, Cin, L = x_bcl.shape
    C, C4 = params["C"], params["C4"]
    kern = functools.partial(fused_kernel, C=C, C4=C4, L=L)

    w_keys = ("w1T", "b1c", "w2T", "b2c", "w3T", "b3c")
    w_bytes = sum(int(params[k].size) * params[k].dtype.itemsize for k in w_keys)
    cost = pl.CostEstimate(
        flops=2 * B * L * (Cin * (C + C4) + 5 * C * C + 2 * C * C4),
        transcendentals=B * L * (3 * C + 2 * C4),
        bytes_accessed=int(x_bcl.size) * 2 + B * C4 * 2 * L * 4 + w_bytes,
    )

    return pl.pallas_call(
        kern,
        out_shape=jax.ShapeDtypeStruct((B, C4, 2 * L), jnp.float32),
        grid=(B,),
        in_specs=[
            pl.BlockSpec((None, Cin, L), lambda b: (b, 0, 0)),        # x, one batch row
            pl.BlockSpec((C + C4, Cin), lambda b: (0, 0)),            # stacked 1x1 weights
            pl.BlockSpec((C + C4, 1), lambda b: (0, 0)),              # stacked biases
            pl.BlockSpec((4, C, C), lambda b: (0, 0, 0)),             # conv2 taps (+tap0+tap1)
            pl.BlockSpec((C, 1), lambda b: (0, 0)),
            pl.BlockSpec((C4, C), lambda b: (0, 0)),                  # conv3 weight
            pl.BlockSpec((C4, 1), lambda b: (0, 0)),
        ],
        out_specs=pl.BlockSpec((None, C4, 2 * L), lambda b: (b, 0, 0)),
        compiler_params=pltpu.CompilerParams(
            dimension_semantics=("parallel",),                        # megacore / v7x 2-TC split
        ),
        cost_estimate=cost,
    )(x_bcl, params["w1T"], params["b1c"], params["w2T"], params["b2c"],
      params["w3T"], params["b3c"])


# ---------------------------------------------------------------------------
# Full forward pass (mirrors Decoder_Bottleneck.forward for this instantiation).
# ---------------------------------------------------------------------------
def decoder_bottleneck_forward(x_ncl, params, lengths, stride):
    size = lengths[-1]            # mirrors self.lengths.pop() without mutating the caller's list
    B, Cin, L = x_ncl.shape
    C4 = params["C4"]
    # Specialised to the stride=2 nearest-upsample with the trim branch taken.
    assert stride == 2 and size == stride * L - 1

    out2 = fused_forward(x_ncl.astype(jnp.bfloat16), params)          # (B, C4, 2L) = [even | odd]
    # Interleave parities (small transpose on the final output), trim to `size`.
    out = out2.reshape(B, C4, 2, L)
    out = jnp.transpose(out, (0, 1, 3, 2)).reshape(B, C4, 2 * L)
    return out[:, :, :size]                                           # (B, 4*out_channels, size)


# ---------------------------------------------------------------------------
# Parameter construction / BN folding / weight fusion (glue, runs once in XLA)
# ---------------------------------------------------------------------------
def fold_bn(w, b, gamma, beta, mean, var, eps=1e-5):
    s = gamma / jnp.sqrt(var + eps)
    return w * s, (b - mean) * s + beta


def prepare_fused_params(raw, C, C4):
    w1f, b1f = fold_bn(raw["W1"], raw["b1"], *raw["bn1"])             # (Cin, C),  (C,)
    w2f, b2f = fold_bn(raw["W2"], raw["b2"], *raw["bn2"])             # (3, C, C), (C,)
    w3f, b3f = fold_bn(raw["W3"], raw["b3"], *raw["bn3"])             # (C, C4),   (C4,)
    wif, bif = fold_bn(raw["Wi"], raw["bi"], *raw["bni"])             # (Cin, C4), (C4,)
    # Transposed (out-channels on sublanes) for the channels x positions layout.
    w1T = jnp.concatenate([w1f.T, wif.T], axis=0)                     # (C+C4, Cin)
    w2T = jnp.stack([w2f[0].T, w2f[1].T, w2f[2].T,
                     (w2f[0] + w2f[1]).T], axis=0)                    # (4, C, C)
    return dict(
        C=C, C4=C4,
        w1T=w1T.astype(jnp.bfloat16),
        b1c=jnp.concatenate([b1f, bif]).reshape(-1, 1),               # (C+C4, 1) f32
        w2T=w2T.astype(jnp.bfloat16),
        b2c=b2f.reshape(-1, 1),                                       # (C, 1)  f32
        w3T=w3f.T.astype(jnp.bfloat16),                               # (C4, C)
        b3c=b3f.reshape(-1, 1),                                       # (C4, 1) f32
    )


def make_params(key, Cin, C, C4):
    ks = jax.random.split(key, 20)
    def w(k, shape): return jax.random.normal(k, shape, jnp.float32) * 0.1
    def bn(k, n):
        k1, k2, k3, k4 = jax.random.split(k, 4)
        return (1.0 + 0.1 * jax.random.normal(k1, (n,), jnp.float32),      # gamma
                0.1 * jax.random.normal(k2, (n,), jnp.float32),            # beta
                0.1 * jax.random.normal(k3, (n,), jnp.float32),            # running_mean
                0.5 + jnp.abs(jax.random.normal(k4, (n,), jnp.float32)))   # running_var
    raw = dict(
        W1=w(ks[0], (Cin, C)),    b1=w(ks[1], (C,)),   bn1=bn(ks[2], C),
        W2=w(ks[3], (3, C, C)),   b2=w(ks[4], (C,)),   bn2=bn(ks[5], C),
        W3=w(ks[6], (C, C4)),     b3=w(ks[7], (C4,)),  bn3=bn(ks[8], C4),
        Wi=w(ks[9], (Cin, C4)),   bi=w(ks[10], (C4,)), bni=bn(ks[11], C4),
    )
    return raw, prepare_fused_params(raw, C, C4)


# ---------------------------------------------------------------------------
# Pure-JAX reference (mirrors the PyTorch forward exactly, eval-mode BN)
# ---------------------------------------------------------------------------
def reference_forward(x_ncl, raw, lengths, stride):
    size = lengths[-1]
    HI = lax.Precision.HIGHEST
    def bn(x, g, b, m, v, eps=1e-5):
        return (x - m[None, :, None]) / jnp.sqrt(v[None, :, None] + eps) * g[None, :, None] + b[None, :, None]
    def conv1x1(x, w, b):
        return jnp.einsum("bcl,co->bol", x, w, precision=HI) + b[None, :, None]
    def conv3(x, w, b):
        xp = jnp.pad(x, ((0, 0), (0, 0), (1, 1)))
        L = x.shape[-1]
        y = sum(jnp.einsum("bcl,co->bol", xp[:, :, k:k + L], w[k], precision=HI) for k in range(3))
        return y + b[None, :, None]
    def elu(x): return jnp.where(x > 0, x, jnp.expm1(x))

    h = elu(bn(conv1x1(x_ncl, raw["W1"], raw["b1"]), *raw["bn1"]))
    h = jnp.repeat(h, stride, axis=-1)
    if h.shape[-1] == size + 1:
        h = h[:, :, :-1]
    h = elu(bn(conv3(h, raw["W2"], raw["b2"]), *raw["bn2"]))
    h = bn(conv1x1(h, raw["W3"], raw["b3"]), *raw["bn3"])
    idn = bn(conv1x1(x_ncl, raw["Wi"], raw["bi"]), *raw["bni"])
    idn = jnp.repeat(idn, stride, axis=-1)
    if idn.shape[-1] == size + 1:
        idn = idn[:, :, :-1]
    return elu(h + idn)


if __name__ == "__main__":
    B, Cin, L = 4, 16, 128        # batch, in_channels, input length (lane-dense: 2L = 256)
    Cout = 8                      # out_channels
    C4 = 4 * Cout                 # expansion=4, last_layer_of_block=False
    stride = 2
    lengths = [stride * L - 1]    # 255 -> upsampled length 256 == size+1 -> trim branch

    key = jax.random.PRNGKey(0)
    kx, kp = jax.random.split(key)
    x = jax.random.normal(kx, (B, Cin, L), jnp.float32)   # PyTorch NCL input

    raw, fused = make_params(kp, Cin, Cout, C4)

    out = decoder_bottleneck_forward(x, fused, lengths, stride)
    out = jax.block_until_ready(out)

    ref = reference_forward(x, raw, lengths, stride)
    assert out.shape == (B, C4, stride * L - 1), out.shape
    assert bool(jnp.all(jnp.isfinite(out)))
    err = float(jnp.max(jnp.abs(out - ref)))
    # bf16 matmul operands (intentional, MXU-native); f32 accumulation/elementwise.
    assert bool(jnp.allclose(out, ref, atol=3e-2, rtol=3e-2)), err
    print("KERNEL_OK")
</pallas_src>

<mosaic_0001>
module attributes {stable_mosaic.version = 11 : i64} {
  func.func @fused_kernel(%arg0: i32, %arg1: memref<1x16x128xbf16, #tpu.memory_space<vmem>>, %arg2: memref<40x16xbf16, #tpu.memory_space<vmem>>, %arg3: memref<40x1xf32, #tpu.memory_space<vmem>>, %arg4: memref<4x8x8xbf16, #tpu.memory_space<vmem>>, %arg5: memref<8x1xf32, #tpu.memory_space<vmem>>, %arg6: memref<32x8xbf16, #tpu.memory_space<vmem>>, %arg7: memref<32x1xf32, #tpu.memory_space<vmem>>, %arg8: memref<1x32x256xf32, #tpu.memory_space<vmem>>) attributes {dimension_semantics = [#tpu.dimension_semantics<parallel>], iteration_bounds = array<i64: 4>, scalar_prefetch = 0 : i64, scratch_operands = 0 : i64, tpu.core_type = #tpu.core_type<tc>, window_params = [{transform_indices = @transform_0, window_bounds = array<i64: 1, 16, 128>}, {pipeline_mode = #tpu.pipeline_mode<synchronous>, transform_indices = @transform_1, window_bounds = array<i64: 40, 16>}, {pipeline_mode = #tpu.pipeline_mode<synchronous>, transform_indices = @transform_2, window_bounds = array<i64: 40, 1>}, {pipeline_mode = #tpu.pipeline_mode<synchronous>, transform_indices = @transform_3, window_bounds = array<i64: 4, 8, 8>}, {pipeline_mode = #tpu.pipeline_mode<synchronous>, transform_indices = @transform_4, window_bounds = array<i64: 8, 1>}, {pipeline_mode = #tpu.pipeline_mode<synchronous>, transform_indices = @transform_5, window_bounds = array<i64: 32, 8>}, {pipeline_mode = #tpu.pipeline_mode<synchronous>, transform_indices = @transform_6, window_bounds = array<i64: 32, 1>}, {transform_indices = @transform_7, window_bounds = array<i64: 1, 32, 256>}]} {
    %c0 = arith.constant 0 : index
    %c0_0 = arith.constant 0 : index
    %c0_1 = arith.constant 0 : index
    %0 = vector.load %arg1[%c0, %c0_0, %c0_1] : memref<1x16x128xbf16, #tpu.memory_space<vmem>>, vector<1x16x128xbf16>
    %1 = vector.shape_cast %0 : vector<1x16x128xbf16> to vector<16x128xbf16>
    %c0_2 = arith.constant 0 : index
    %c0_3 = arith.constant 0 : index
    %2 = vector.load %arg2[%c0_2, %c0_3] : memref<40x16xbf16, #tpu.memory_space<vmem>>, vector<40x16xbf16>
    %cst = arith.constant dense<0.000000e+00> : vector<40x128xf32>
    %3 = tpu.matmul %2, %1, %cst {dimension_numbers = #tpu.dot_dimension_numbers<[1], [0], [0], [1], [0, 0, 1, 1], [], []>} : vector<40x16xbf16>, vector<16x128xbf16>, vector<40x128xf32> -> vector<40x128xf32>
    %c0_4 = arith.constant 0 : index
    %c0_5 = arith.constant 0 : index
    %4 = vector.load %arg3[%c0_4, %c0_5] : memref<40x1xf32, #tpu.memory_space<vmem>>, vector<40x1xf32>
    %5 = vector.broadcast %4 : vector<40x1xf32> to vector<40x128xf32>
    %6 = arith.addf %3, %5 : vector<40x128xf32>
    %7 = vector.extract_strided_slice %6 {offsets = [0, 0], sizes = [8, 128], strides = [1, 1]} : vector<40x128xf32> to vector<8x128xf32>
    %cst_6 = arith.constant 0.000000e+00 : f32
    %8 = vector.broadcast %cst_6 : f32 to vector<8x128xf32>
    %9 = arith.cmpf ogt, %7, %8 : vector<8x128xf32>
    %cst_7 = arith.constant 0.000000e+00 : f32
    %10 = vector.broadcast %cst_7 : f32 to vector<8x128xf32>
    %11 = arith.minimumf %7, %10 : vector<8x128xf32>
    %12 = math.exp %11 : vector<8x128xf32>
    %cst_8 = arith.constant 1.000000e+00 : f32
    %13 = vector.broadcast %cst_8 : f32 to vector<8x128xf32>
    %14 = arith.subf %12, %13 : vector<8x128xf32>
    %15 = arith.select %9, %7, %14 : vector<8x128xi1>, vector<8x128xf32>
    %16 = vector.extract_strided_slice %6 {offsets = [8, 0], sizes = [32, 128], strides = [1, 1]} : vector<40x128xf32> to vector<32x128xf32>
    %17 = tpu.iota {dimensions = array<i32: 1>} : vector<1x128xi32>
    %c0_i32 = arith.constant 0 : i32
    %18 = vector.broadcast %c0_i32 : i32 to vector<1x128xi32>
    %19 = arith.cmpi sgt, %17, %18 : vector<1x128xi32>
    %20 = arith.extui %19 : vector<1x128xi1> to vector<1x128xi32>
    %21 = arith.sitofp %20 : vector<1x128xi32> to vector<1x128xf32>
    %c127_i32 = arith.constant 127 : i32
    %22 = vector.broadcast %c127_i32 : i32 to vector<1x128xi32>
    %23 = arith.cmpi slt, %17, %22 : vector<1x128xi32>
    %24 = arith.extui %23 : vector<1x128xi1> to vector<1x128xi32>
    %25 = arith.sitofp %24 : vector<1x128xi32> to vector<1x128xf32>
    %c1_i32 = arith.constant 1 : i32
    %26 = tpu.dynamic_rotate %15 by %c1_i32 dim 1 : vector<8x128xf32>, i32 -> vector<8x128xf32>
    %27 = vector.broadcast %21 : vector<1x128xf32> to vector<8x128xf32>
    %28 = arith.mulf %26, %27 : vector<8x128xf32>
    %c127_i32_9 = arith.constant 127 : i32
    %29 = tpu.dynamic_rotate %15 by %c127_i32_9 dim 1 : vector<8x128xf32>, i32 -> vector<8x128xf32>
    %30 = vector.broadcast %25 : vector<1x128xf32> to vector<8x128xf32>
    %31 = arith.mulf %29, %30 : vector<8x128xf32>
    %32 = vector.broadcast %25 : vector<1x128xf32> to vector<8x128xf32>
    %33 = arith.mulf %15, %32 : vector<8x128xf32>
    %34 = arith.truncf %15 : vector<8x128xf32> to vector<8x128xbf16>
    %35 = arith.truncf %28 : vector<8x128xf32> to vector<8x128xbf16>
    %36 = arith.truncf %31 : vector<8x128xf32> to vector<8x128xbf16>
    %37 = arith.truncf %33 : vector<8x128xf32> to vector<8x128xbf16>
    %c0_10 = arith.constant 0 : index
    %c0_11 = arith.constant 0 : index
    %c0_12 = arith.constant 0 : index
    %38 = vector.load %arg4[%c0_10, %c0_11, %c0_12] : memref<4x8x8xbf16, #tpu.memory_space<vmem>>, vector<1x8x8xbf16>
    %39 = vector.shape_cast %38 : vector<1x8x8xbf16> to vector<8x8xbf16>
    %cst_13 = arith.constant dense<0.000000e+00> : vector<8x128xf32>
    %40 = tpu.matmul %39, %35, %cst_13 {dimension_numbers = #tpu.dot_dimension_numbers<[1], [0], [0], [1], [0, 0, 1, 1], [], []>} : vector<8x8xbf16>, vector<8x128xbf16>, vector<8x128xf32> -> vector<8x128xf32>
    %c1 = arith.constant 1 : index
    %c0_14 = arith.constant 0 : index
    %c0_15 = arith.constant 0 : index
    %41 = vector.load %arg4[%c1, %c0_14, %c0_15] : memref<4x8x8xbf16, #tpu.memory_space<vmem>>, vector<1x8x8xbf16>
    %42 = vector.shape_cast %41 : vector<1x8x8xbf16> to vector<8x8xbf16>
    %cst_16 = arith.constant dense<0.000000e+00> : vector<8x128xf32>
    %43 = tpu.matmul %42, %34, %cst_16 {dimension_numbers = #tpu.dot_dimension_numbers<[1], [0], [0], [1], [0, 0, 1, 1], [], []>} : vector<8x8xbf16>, vector<8x128xbf16>, vector<8x128xf32> -> vector<8x128xf32>
    %44 = arith.addf %40, %43 : vector<8x128xf32>
    %c2 = arith.constant 2 : index
    %c0_17 = arith.constant 0 : index
    %c0_18 = arith.constant 0 : index
    %45 = vector.load %arg4[%c2, %c0_17, %c0_18] : memref<4x8x8xbf16, #tpu.memory_space<vmem>>, vector<1x8x8xbf16>
    %46 = vector.shape_cast %45 : vector<1x8x8xbf16> to vector<8x8xbf16>
    %cst_19 = arith.constant dense<0.000000e+00> : vector<8x128xf32>
    %47 = tpu.matmul %46, %37, %cst_19 {dimension_numbers = #tpu.dot_dimension_numbers<[1], [0], [0], [1], [0, 0, 1, 1], [], []>} : vector<8x8xbf16>, vector<8x128xbf16>, vector<8x128xf32> -> vector<8x128xf32>
    %48 = arith.addf %44, %47 : vector<8x128xf32>
    %c0_20 = arith.constant 0 : index
    %c0_21 = arith.constant 0 : index
    %49 = vector.load %arg5[%c0_20, %c0_21] : memref<8x1xf32, #tpu.memory_space<vmem>>, vector<8x1xf32>
    %50 = vector.broadcast %49 : vector<8x1xf32> to vector<8x128xf32>
    %51 = arith.addf %48, %50 : vector<8x128xf32>
    %c3 = arith.constant 3 : index
    %c0_22 = arith.constant 0 : index
    %c0_23 = arith.constant 0 : index
    %52 = vector.load %arg4[%c3, %c0_22, %c0_23] : memref<4x8x8xbf16, #tpu.memory_space<vmem>>, vector<1x8x8xbf16>
    %53 = vector.shape_cast %52 : vector<1x8x8xbf16> to vector<8x8xbf16>
    %cst_24 = arith.constant dense<0.000000e+00> : vector<8x128xf32>
    %54 = tpu.matmul %53, %34, %cst_24 {dimension_numbers = #tpu.dot_dimension_numbers<[1], [0], [0], [1], [0, 0, 1, 1], [], []>} : vector<8x8xbf16>, vector<8x128xbf16>, vector<8x128xf32> -> vector<8x128xf32>
    %c2_25 = arith.constant 2 : index
    %c0_26 = arith.constant 0 : index
    %c0_27 = arith.constant 0 : index
    %55 = vector.load %arg4[%c2_25, %c0_26, %c0_27] : memref<4x8x8xbf16, #tpu.memory_space<vmem>>, vector<1x8x8xbf16>
    %56 = vector.shape_cast %55 : vector<1x8x8xbf16> to vector<8x8xbf16>
    %cst_28 = arith.constant dense<0.000000e+00> : vector<8x128xf32>
    %57 = tpu.matmul %56, %36, %cst_28 {dimension_numbers = #tpu.dot_dimension_numbers<[1], [0], [0], [1], [0, 0, 1, 1], [], []>} : vector<8x8xbf16>, vector<8x128xbf16>, vector<8x128xf32> -> vector<8x128xf32>
    %58 = arith.addf %54, %57 : vector<8x128xf32>
    %c0_29 = arith.constant 0 : index
    %c0_30 = arith.constant 0 : index
    %59 = vector.load %arg5[%c0_29, %c0_30] : memref<8x1xf32, #tpu.memory_space<vmem>>, vector<8x1xf32>
    %60 = vector.broadcast %59 : vector<8x1xf32> to vector<8x128xf32>
    %61 = arith.addf %58, %60 : vector<8x128xf32>
    %cst_31 = arith.constant 0.000000e+00 : f32
    %62 = vector.broadcast %cst_31 : f32 to vector<8x128xf32>
    %63 = arith.cmpf ogt, %51, %62 : vector<8x128xf32>
    %cst_32 = arith.constant 0.000000e+00 : f32
    %64 = vector.broadcast %cst_32 : f32 to vector<8x128xf32>
    %65 = arith.minimumf %51, %64 : vector<8x128xf32>
    %66 = math.exp %65 : vector<8x128xf32>
    %cst_33 = arith.constant 1.000000e+00 : f32
    %67 = vector.broadcast %cst_33 : f32 to vector<8x128xf32>
    %68 = arith.subf %66, %67 : vector<8x128xf32>
    %69 = arith.select %63, %51, %68 : vector<8x128xi1>, vector<8x128xf32>
    %70 = arith.truncf %69 : vector<8x128xf32> to vector<8x128xbf16>
    %cst_34 = arith.constant 0.000000e+00 : f32
    %71 = vector.broadcast %cst_34 : f32 to vector<8x128xf32>
    %72 = arith.cmpf ogt, %61, %71 : vector<8x128xf32>
    %cst_35 = arith.constant 0.000000e+00 : f32
    %73 = vector.broadcast %cst_35 : f32 to vector<8x128xf32>
    %74 = arith.minimumf %61, %73 : vector<8x128xf32>
    %75 = math.exp %74 : vector<8x128xf32>
    %cst_36 = arith.constant 1.000000e+00 : f32
    %76 = vector.broadcast %cst_36 : f32 to vector<8x128xf32>
    %77 = arith.subf %75, %76 : vector<8x128xf32>
    %78 = arith.select %72, %61, %77 : vector<8x128xi1>, vector<8x128xf32>
    %79 = arith.truncf %78 : vector<8x128xf32> to vector<8x128xbf16>
    %c0_37 = arith.constant 0 : index
    %c0_38 = arith.constant 0 : index
    %80 = vector.load %arg6[%c0_37, %c0_38] : memref<32x8xbf16, #tpu.memory_space<vmem>>, vector<32x8xbf16>
    %cst_39 = arith.constant dense<0.000000e+00> : vector<32x128xf32>
    %81 = tpu.matmul %80, %70, %cst_39 {dimension_numbers = #tpu.dot_dimension_numbers<[1], [0], [0], [1], [0, 0, 1, 1], [], []>} : vector<32x8xbf16>, vector<8x128xbf16>, vector<32x128xf32> -> vector<32x128xf32>
    %c0_40 = arith.constant 0 : index
    %c0_41 = arith.constant 0 : index
    %82 = vector.load %arg7[%c0_40, %c0_41] : memref<32x1xf32, #tpu.memory_space<vmem>>, vector<32x1xf32>
    %83 = vector.broadcast %82 : vector<32x1xf32> to vector<32x128xf32>
    %84 = arith.addf %81, %83 : vector<32x128xf32>
    %c0_42 = arith.constant 0 : index
    %c0_43 = arith.constant 0 : index
    %85 = vector.load %arg6[%c0_42, %c0_43] : memref<32x8xbf16, #tpu.memory_space<vmem>>, vector<32x8xbf16>
    %cst_44 = arith.constant dense<0.000000e+00> : vector<32x128xf32>
    %86 = tpu.matmul %85, %79, %cst_44 {dimension_numbers = #tpu.dot_dimension_numbers<[1], [0], [0], [1], [0, 0, 1, 1], [], []>} : vector<32x8xbf16>, vector<8x128xbf16>, vector<32x128xf32> -> vector<32x128xf32>
    %c0_45 = arith.constant 0 : index
    %c0_46 = arith.constant 0 : index
    %87 = vector.load %arg7[%c0_45, %c0_46] : memref<32x1xf32, #tpu.memory_space<vmem>>, vector<32x1xf32>
    %88 = vector.broadcast %87 : vector<32x1xf32> to vector<32x128xf32>
    %89 = arith.addf %86, %88 : vector<32x128xf32>
    %90 = arith.addf %84, %16 : vector<32x128xf32>
    %cst_47 = arith.constant 0.000000e+00 : f32
    %91 = vector.broadcast %cst_47 : f32 to vector<32x128xf32>
    %92 = arith.cmpf ogt, %90, %91 : vector<32x128xf32>
    %cst_48 = arith.constant 0.000000e+00 : f32
    %93 = vector.broadcast %cst_48 : f32 to vector<32x128xf32>
    %94 = arith.minimumf %90, %93 : vector<32x128xf32>
    %95 = math.exp %94 : vector<32x128xf32>
    %cst_49 = arith.constant 1.000000e+00 : f32
    %96 = vector.broadcast %cst_49 : f32 to vector<32x128xf32>
    %97 = arith.subf %95, %96 : vector<32x128xf32>
    %98 = arith.select %92, %90, %97 : vector<32x128xi1>, vector<32x128xf32>
    %c0_50 = arith.constant 0 : index
    %c0_51 = arith.constant 0 : index
    %c0_52 = arith.constant 0 : index
    %99 = vector.load %arg8[%c0_50, %c0_51, %c0_52] : memref<1x32x256xf32, #tpu.memory_space<vmem>>, vector<1x32x128xf32>
    %100 = vector.shape_cast %99 : vector<1x32x128xf32> to vector<32x128xf32>
    %101 = vector.shape_cast %98 : vector<32x128xf32> to vector<1x32x128xf32>
    tpu.vector_store %arg8[%c0_50, %c0_51, %c0_52], %101 {strides = array<i32>} : memref<1x32x256xf32, #tpu.memory_space<vmem>>, vector<1x32x128xf32>,
    %102 = arith.addf %89, %16 : vector<32x128xf32>
    %cst_53 = arith.constant 0.000000e+00 : f32
    %103 = vector.broadcast %cst_53 : f32 to vector<32x128xf32>
    %104 = arith.cmpf ogt, %102, %103 : vector<32x128xf32>
    %cst_54 = arith.constant 0.000000e+00 : f32
    %105 = vector.broadcast %cst_54 : f32 to vector<32x128xf32>
    %106 = arith.minimumf %102, %105 : vector<32x128xf32>
    %107 = math.exp %106 : vector<32x128xf32>
    %cst_55 = arith.constant 1.000000e+00 : f32
    %108 = vector.broadcast %cst_55 : f32 to vector<32x128xf32>
    %109 = arith.subf %107, %108 : vector<32x128xf32>
    %110 = arith.select %104, %102, %109 : vector<32x128xi1>, vector<32x128xf32>
    %c0_56 = arith.constant 0 : index
    %c0_57 = arith.constant 0 : index
    %c128 = arith.constant 128 : index
    %111 = vector.load %arg8[%c0_56, %c0_57, %c128] : memref<1x32x256xf32, #tpu.memory_space<vmem>>, vector<1x32x128xf32>
    %112 = vector.shape_cast %111 : vector<1x32x128xf32> to vector<32x128xf32>
    %113 = vector.shape_cast %110 : vector<32x128xf32> to vector<1x32x128xf32>
    tpu.vector_store %arg8[%c0_56, %c0_57, %c128], %113 {strides = array<i32>} : memref<1x32x256xf32, #tpu.memory_space<vmem>>, vector<1x32x128xf32>,
    return
  }
  func.func @transform_0(%arg0: i32) -> (i32, i32, i32) {
    %c0_i32 = arith.constant 0 : i32
    %c0_i32_0 = arith.constant 0 : i32
    %c0_i32_1 = arith.constant 0 : i32
    return %arg0, %c0_i32, %c0_i32_0 : i32, i32, i32
  }
  func.func @transform_1(%arg0: i32) -> (i32, i32) {
    %c0_i32 = arith.constant 0 : i32
    %c0_i32_0 = arith.constant 0 : i32
    %c0_i32_1 = arith.constant 0 : i32
    return %c0_i32, %c0_i32_0 : i32, i32
  }
  func.func @transform_2(%arg0: i32) -> (i32, i32) {
    %c0_i32 = arith.constant 0 : i32
    %c0_i32_0 = arith.constant 0 : i32
    %c0_i32_1 = arith.constant 0 : i32
    return %c0_i32, %c0_i32_0 : i32, i32
  }
  func.func @transform_3(%arg0: i32) -> (i32, i32, i32) {
    %c0_i32 = arith.constant 0 : i32
    %c0_i32_0 = arith.constant 0 : i32
    %c0_i32_1 = arith.constant 0 : i32
    %c0_i32_2 = arith.constant 0 : i32
    return %c0_i32, %c0_i32_0, %c0_i32_1 : i32, i32, i32
  }
  func.func @transform_4(%arg0: i32) -> (i32, i32) {
    %c0_i32 = arith.constant 0 : i32
    %c0_i32_0 = arith.constant 0 : i32
    %c0_i32_1 = arith.constant 0 : i32
    return %c0_i32, %c0_i32_0 : i32, i32
  }
  func.func @transform_5(%arg0: i32) -> (i32, i32) {
    %c0_i32 = arith.constant 0 : i32
    %c0_i32_0 = arith.constant 0 : i32
    %c0_i32_1 = arith.constant 0 : i32
    return %c0_i32, %c0_i32_0 : i32, i32
  }
  func.func @transform_6(%arg0: i32) -> (i32, i32) {
    %c0_i32 = arith.constant 0 : i32
    %c0_i32_0 = arith.constant 0 : i32
    %c0_i32_1 = arith.constant 0 : i32
    return %c0_i32, %c0_i32_0 : i32, i32
  }
  func.func @transform_7(%arg0: i32) -> (i32, i32, i32) {
    %c0_i32 = arith.constant 0 : i32
    %c0_i32_0 = arith.constant 0 : i32
    %c0_i32_1 = arith.constant 0 : i32
    return %arg0, %c0_i32, %c0_i32_0 : i32, i32, i32
  }
}

</mosaic_0001>

<llo_original>
// kernel: tpu_custom_call.1
$region0: #{tpu_custom_call.1}
  #allocation0 [shape = 'u32[]', space=smem, size = 0x4, offset = 0x4, fixed_abs, tag = 'smem constant byte address 0x4 - core index']
  #allocation1 [shape = 'u32[72,128]{1,0:T(1,128)}', space=vmem, size = 0x9000, scoped, tag = 'internal scratch']
  %s0 = inlined_call_operand.vmem [shape: bf16[4,16,128], index: 0, kind: input, shape index: {}]
  %s1 = inlined_call_operand.vmem [shape: bf16[40,16], index: 1, kind: input, shape index: {}]
  %s2 = inlined_call_operand.vmem [shape: f32[40,1], index: 2, kind: input, shape index: {}]
  %s3 = inlined_call_operand.vmem [shape: bf16[4,8,8], index: 3, kind: input, shape index: {}]
  %s4 = inlined_call_operand.vmem [shape: f32[8,1], index: 4, kind: input, shape index: {}]
  %s5 = inlined_call_operand.vmem [shape: bf16[32,8], index: 5, kind: input, shape index: {}]
  %s6 = inlined_call_operand.vmem [shape: f32[32,1], index: 6, kind: input, shape index: {}]
  %s7 = inlined_call_operand.hbm [shape: f32[4,32,256], index: 7, kind: output, shape index: {}]
  %s8 = sld [smem:[#allocation0]]
  $region61: #{tpu_custom_call.1} parent=0
    _
  %s10 = ssub.s32 1, %s8
  %s11 = scalar_select 0, %s10, %s8
  $region1: #{tpu_custom_call.1} parent=0
    #allocation2 [shape = 'u8[65536]{0}', space=vmem, size = 0x10000, scoped, tag = 'output window, operand 0']
    #allocation3 [shape = 's32[2]{0}', space=sflag, size = 0x8, scoped, tag = 'scoped memory for tpu_custom_call.1']
    %12 = vsyncpa [#allocation3], 0
    %s13 = scalar_lea.sflag [#allocation3], 1
    %14 = vsyncpa %s13, 0
    loop: start=0, step=1, limit=6
    $region2: #{tpu_custom_call.1} parent=1 // loop_pre_header
      _
    $region3: #{tpu_custom_call.1} parent=1 // loop_header
      %s16 = sphi 0, %s20
      %p17 = scmp.ge.s32.totalorder %s16, 6
      %s26 = sphi 0, %s28
      %s29 = sphi 0, %s26
      %s30 = sphi 0, %s29
      %s46 = sphi 0, %s30
      %s50 = sphi 0, %s50
      %s52 = sphi 0, %s50
      %s53 = sphi 0, %s52
      %s67 = sphi 0, %s53
      %s71 = sphi 0, %s71
      %s73 = sphi 0, %s71
      %s74 = sphi 0, %s73
      %s88 = sphi 0, %s74
      %s92 = sphi 0, %s92
      %s94 = sphi 0, %s92
      %s95 = sphi 0, %s94
      %s109 = sphi 0, %s95
      %s113 = sphi 0, %s113
      %s115 = sphi 0, %s113
      %s116 = sphi 0, %s115
      %s130 = sphi 0, %s116
      %s134 = sphi 0, %s134
      %s136 = sphi 0, %s134
      %s137 = sphi 0, %s136
      %s151 = sphi 0, %s137
      %s155 = sphi 0, %s155
      %s157 = sphi 0, %s155
      %s158 = sphi 0, %s157
      %s172 = sphi 0, %s158
      %s178 = sphi 0, %s180
      %s181 = sphi 0, %s178
      %s182 = sphi 0, %s181
      %s198 = sphi 0, %s182
    $region4: #{tpu_custom_call.1} parent=1 // loop_header_branch
      %19 = sbr.rel (%p17) target = $region8
    $region5: #{tpu_custom_call.1} parent=1 // loop_body
      %s21 = ssub.s32 %s16, 1
      %s22 = ssub.s32 %s16, 2
      %s23 = sadd.s32 %s16, 1
      %s24 = ssub.s32 %s16, %s23
      %p25 = scmp.eq.s32.totalorder %s24, 0
      %s27 = sadd.s32 %s26, 1
      %s28 = scalar_select %p25, %s26, %s27
      %p31 = pneg %p25
      %p32 = scmp.eq.s32.totalorder %s16, 3
      %p33 = por %p31, %p32
      %p34 = scmp.ne.s32.totalorder %s26, %s29
      %p35 = scmp.eq.s32.totalorder %s16, 0
      %p36 = por %p34, %p35
      %p37 = scmp.ne.s32.totalorder %s26, %s29
      %p38 = scmp.eq.s32.totalorder %s21, 3
      %p39 = por %p37, %p38
      %p40 = scmp.ne.s32.totalorder %s29, %s30
      %p41 = scmp.eq.s32.totalorder %s21, 0
      %p42 = por %p40, %p41
      %p43 = scmp.ne.s32.totalorder %s29, %s30
      %p44 = scmp.eq.s32.totalorder %s22, 3
      %p45 = por %p43, %p44
      %p47 = scmp.ne.s32.totalorder %s30, %s46
      %p48 = scmp.eq.s32.totalorder %s22, 0
      %p49 = por %p47, %p48
      %s51 = sadd.s32 %s50, 1
      %p54 = scmp.eq.s32.totalorder %s16, 3
      %p55 = scmp.ne.s32.totalorder %s50, %s52
      %p56 = scmp.eq.s32.totalorder %s16, 0
      %p57 = por %p55, %p56
      %p58 = scmp.ne.s32.totalorder %s50, %s52
      %p59 = scmp.eq.s32.totalorder %s21, 3
      %p60 = por %p58, %p59
      %p61 = scmp.ne.s32.totalorder %s52, %s53
      %p62 = scmp.eq.s32.totalorder %s21, 0
      %p63 = por %p61, %p62
      %p64 = scmp.ne.s32.totalorder %s52, %s53
      %p65 = scmp.eq.s32.totalorder %s22, 3
      %p66 = por %p64, %p65
      %p68 = scmp.ne.s32.totalorder %s53, %s67
      %p69 = scmp.eq.s32.totalorder %s22, 0
      %p70 = por %p68, %p69
      %s72 = sadd.s32 %s71, 1
      %p75 = scmp.eq.s32.totalorder %s16, 3
      %p76 = scmp.ne.s32.totalorder %s71, %s73
      %p77 = scmp.eq.s32.totalorder %s16, 0
      %p78 = por %p76, %p77
      %p79 = scmp.ne.s32.totalorder %s71, %s73
      %p80 = scmp.eq.s32.totalorder %s21, 3
      %p81 = por %p79, %p80
      %p82 = scmp.ne.s32.totalorder %s73, %s74
      %p83 = scmp.eq.s32.totalorder %s21, 0
      %p84 = por %p82, %p83
      %p85 = scmp.ne.s32.totalorder %s73, %s74
      %p86 = scmp.eq.s32.totalorder %s22, 3
      %p87 = por %p85, %p86
      %p89 = scmp.ne.s32.totalorder %s74, %s88
      %p90 = scmp.eq.s32.totalorder %s22, 0
      %p91 = por %p89, %p90
      %s93 = sadd.s32 %s92, 1
      %p96 = scmp.eq.s32.totalorder %s16, 3
      %p97 = scmp.ne.s32.totalorder %s92, %s94
      %p98 = scmp.eq.s32.totalorder %s16, 0
      %p99 = por %p97, %p98
      %p100 = scmp.ne.s32.totalorder %s92, %s94
      %p101 = scmp.eq.s32.totalorder %s21, 3
      %p102 = por %p100, %p101
      %p103 = scmp.ne.s32.totalorder %s94, %s95
      %p104 = scmp.eq.s32.totalorder %s21, 0
      %p105 = por %p103, %p104
      %p106 = scmp.ne.s32.totalorder %s94, %s95
      %p107 = scmp.eq.s32.totalorder %s22, 3
      %p108 = por %p106, %p107
      %p110 = scmp.ne.s32.totalorder %s95, %s109
      %p111 = scmp.eq.s32.totalorder %s22, 0
      %p112 = por %p110, %p111
      %s114 = sadd.s32 %s113, 1
      %p117 = scmp.eq.s32.totalorder %s16, 3
      %p118 = scmp.ne.s32.totalorder %s113, %s115
      %p119 = scmp.eq.s32.totalorder %s16, 0
      %p120 = por %p118, %p119
      %p121 = scmp.ne.s32.totalorder %s113, %s115
      %p122 = scmp.eq.s32.totalorder %s21, 3
      %p123 = por %p121, %p122
      %p124 = scmp.ne.s32.totalorder %s115, %s116
      %p125 = scmp.eq.s32.totalorder %s21, 0
      %p126 = por %p124, %p125
      %p127 = scmp.ne.s32.totalorder %s115, %s116
      %p128 = scmp.eq.s32.totalorder %s22, 3
      %p129 = por %p127, %p128
      %p131 = scmp.ne.s32.totalorder %s116, %s130
      %p132 = scmp.eq.s32.totalorder %s22, 0
      %p133 = por %p131, %p132
      %s135 = sadd.s32 %s134, 1
      %p138 = scmp.eq.s32.totalorder %s16, 3
      %p139 = scmp.ne.s32.totalorder %s134, %s136
      %p140 = scmp.eq.s32.totalorder %s16, 0
      %p141 = por %p139, %p140
      %p142 = scmp.ne.s32.totalorder %s134, %s136
      %p143 = scmp.eq.s32.totalorder %s21, 3
      %p144 = por %p142, %p143
      %p145 = scmp.ne.s32.totalorder %s136, %s137
      %p146 = scmp.eq.s32.totalorder %s21, 0
      %p147 = por %p145, %p146
      %p148 = scmp.ne.s32.totalorder %s136, %s137
      %p149 = scmp.eq.s32.totalorder %s22, 3
      %p150 = por %p148, %p149
      %p152 = scmp.ne.s32.totalorder %s137, %s151
      %p153 = scmp.eq.s32.totalorder %s22, 0
      %p154 = por %p152, %p153
      %s156 = sadd.s32 %s155, 1
      %p159 = scmp.eq.s32.totalorder %s16, 3
      %p160 = scmp.ne.s32.totalorder %s155, %s157
      %p161 = scmp.eq.s32.totalorder %s16, 0
      %p162 = por %p160, %p161
      %p163 = scmp.ne.s32.totalorder %s155, %s157
      %p164 = scmp.eq.s32.totalorder %s21, 3
      %p165 = por %p163, %p164
      %p166 = scmp.ne.s32.totalorder %s157, %s158
      %p167 = scmp.eq.s32.totalorder %s21, 0
      %p168 = por %p166, %p167
      %p169 = scmp.ne.s32.totalorder %s157, %s158
      %p170 = scmp.eq.s32.totalorder %s22, 3
      %p171 = por %p169, %p170
      %p173 = scmp.ne.s32.totalorder %s158, %s172
      %p174 = scmp.eq.s32.totalorder %s22, 0
      %p175 = por %p173, %p174
      %s176 = ssub.s32 %s16, %s23
      %p177 = scmp.eq.s32.totalorder %s176, 0
      %s179 = sadd.s32 %s178, 1
      %s180 = scalar_select %p177, %s178, %s179
      %p183 = pneg %p177
      %p184 = scmp.eq.s32.totalorder %s16, 3
      %p185 = por %p183, %p184
      %p186 = scmp.ne.s32.totalorder %s178, %s181
      %p187 = scmp.eq.s32.totalorder %s16, 0
      %p188 = por %p186, %p187
      %p189 = scmp.ne.s32.totalorder %s178, %s181
      %p190 = scmp.eq.s32.totalorder %s21, 3
      %p191 = por %p189, %p190
      %p192 = scmp.ne.s32.totalorder %s181, %s182
      %p193 = scmp.eq.s32.totalorder %s21, 0
      %p194 = por %p192, %p193
      %p195 = scmp.ne.s32.totalorder %s181, %s182
      %p196 = scmp.eq.s32.totalorder %s22, 3
      %p197 = por %p195, %p196
      %p199 = scmp.ne.s32.totalorder %s182, %s198
      %p200 = scmp.eq.s32.totalorder %s22, 0
      %p201 = por %p199, %p200
      %p202 = scmp.le.s32.totalorder 1, %s16
      %p203 = scmp.lt.s32.totalorder %s16, 5
      %p204 = pnand %p202, %p203
      %p205 = pneg %p204
      // Predicated region
      $region9: #{tpu_custom_call.1} parent=5 // pred_check
        _
      $region10: #{tpu_custom_call.1} parent=5 // pred_check_branch
        %207 = sbr.rel (%p204) target = $region12
      $region11: #{tpu_custom_call.1} parent=5 // pred_region
        %s208 = ssub.s32 %s16, 1
        // Predicated region
        $region13: #{tpu_custom_call.1} parent=11 // pred_check
          %p209 = pneg %p63
        $region14: #{tpu_custom_call.1} parent=11 // pred_check_branch
          %211 = sbr.rel (%p209) target = $region16
        $region15: #{tpu_custom_call.1} parent=11 // pred_region
          _
        $region16: #{tpu_custom_call.1} parent=11 // pred_fallthru
          _
        // Predicated region
        $region17: #{tpu_custom_call.1} parent=11 // pred_check
          %p212 = pneg %p84
        $region18: #{tpu_custom_call.1} parent=11 // pred_check_branch
          %214 = sbr.rel (%p212) target = $region20
        $region19: #{tpu_custom_call.1} parent=11 // pred_region
          _
        $region20: #{tpu_custom_call.1} parent=11 // pred_fallthru
          _
        // Predicated region
        $region21: #{tpu_custom_call.1} parent=11 // pred_check
          %p215 = pneg %p105
        $region22: #{tpu_custom_call.1} parent=11 // pred_check_branch
          %217 = sbr.rel (%p215) target = $region24
        $region23: #{tpu_custom_call.1} parent=11 // pred_region
          _
        $region24: #{tpu_custom_call.1} parent=11 // pred_fallthru
          _
        // Predicated region
        $region25: #{tpu_custom_call.1} parent=11 // pred_check
          %p218 = pneg %p126
        $region26: #{tpu_custom_call.1} parent=11 // pred_check_branch
          %220 = sbr.rel (%p218) target = $region28
        $region27: #{tpu_custom_call.1} parent=11 // pred_region
          _
        $region28: #{tpu_custom_call.1} parent=11 // pred_fallthru
          _
        // Predicated region
        $region29: #{tpu_custom_call.1} parent=11 // pred_check
          %p221 = pneg %p147
        $region30: #{tpu_custom_call.1} parent=11 // pred_check_branch
          %223 = sbr.rel (%p221) target = $region32
        $region31: #{tpu_custom_call.1} parent=11 // pred_region
          _
        $region32: #{tpu_custom_call.1} parent=11 // pred_fallthru
          _
        // Predicated region
        $region33: #{tpu_custom_call.1} parent=11 // pred_check
          %p224 = pneg %p168
        $region34: #{tpu_custom_call.1} parent=11 // pred_check_branch
          %226 = sbr.rel (%p224) target = $region36
        $region35: #{tpu_custom_call.1} parent=11 // pred_region
          _
        $region36: #{tpu_custom_call.1} parent=11 // pred_fallthru
          _
      $region12: #{tpu_custom_call.1} parent=5 // pred_fallthru
        _
      %p227 = scmp.lt.s32.totalorder %s16, 4
      // Predicated region
      $region37: #{tpu_custom_call.1} parent=5 // pred_check
        %p228 = pneg %p227
      $region38: #{tpu_custom_call.1} parent=5 // pred_check_branch
        %230 = sbr.rel (%p228) target = $region40
      $region39: #{tpu_custom_call.1} parent=5 // pred_region
        // Predicated region
        $region41: #{tpu_custom_call.1} parent=39 // pred_check
          %p231 = pneg %p36
        $region42: #{tpu_custom_call.1} parent=39 // pred_check_branch
          %233 = sbr.rel (%p231) target = $region44
        $region43: #{tpu_custom_call.1} parent=39 // pred_region
          %p234 = scmp.lt.s32.totalorder %s16, 3
          %s235 = scalar_select %p234, %s16, 3
          %s236 = smul.addr %s235, 2
          %s237 = smul.addr %s236, 4
          %s238 = scalar_lea.vmem %s0, %s237
        $region44: #{tpu_custom_call.1} parent=39 // pred_fallthru
          _
      $region40: #{tpu_custom_call.1} parent=5 // pred_fallthru
        _
      %p239 = scmp.le.s32.totalorder 1, %s16
      %p240 = scmp.lt.s32.totalorder %s16, 5
      %p241 = pnand %p239, %p240
      %p242 = pneg %p241
      // Predicated region
      $region45: #{tpu_custom_call.1} parent=5 // pred_check
        _
      $region46: #{tpu_custom_call.1} parent=5 // pred_check_branch
        %244 = sbr.rel (%p241) target = $region48
      $region47: #{tpu_custom_call.1} parent=5 // pred_region
        %s245 = ssub.s32 %s16, 1
        %p246 = scmp.lt.s32.totalorder %s21, 3
        %s247 = scalar_select %p246, %s21, 3
        %s248 = smul.addr %s247, 2
        %s249 = smul.addr %s248, 4
        %s250 = scalar_lea.vmem %s0, %s249
        %p251 = pneg %p42
        %p252 = pneg %p39
        %p253 = pneg %p63
        %p254 = pneg %p60
        %p255 = pneg %p84
        %p256 = pneg %p81
        %p257 = pneg %p105
        %p258 = pneg %p102
        %p259 = pneg %p126
        %p260 = pneg %p123
        %p261 = pneg %p147
        %p262 = pneg %p144
        %p263 = pneg %p168
        %p264 = pneg %p165
        %p265 = pneg %p194
        %p266 = pneg %p191
        %s267 = sand.u32 %s181, 1
        %s268 = scalar_lea.sflag [#allocation3], %s267
        %s269 = sand.u32 %s181, 1
        %s270 = smul.addr %s269, 64
        %s271 = scalar_lea.vmem [#allocation2], %s270
        %p272 = scmp.lt.s32.totalorder %s21, 3
        %s273 = scalar_select %p272, %s21, 3
        %s274 = smul.addr %s273, 2
        %s275 = smul.addr %s274, 4
        %s276 = scalar_lea.vmem %s0, %s275
        %v278 = vld [vmem:[%s276] sm:$0xf]
        %v279 = vld [vmem:[%s276 + $0x4] sm:$0xf]
        %v280 = vld [vmem:[%s1] sm:$0xf]
        %v281 = vld [vmem:[%s1 + $0x4] sm:$0xf]
        %v282 = vld [vmem:[%s1 + $0x8] sm:$0xf]
        %v283 = vld [vmem:[%s1 + $0xc] sm:$0xf]
        %v284 = vld [vmem:[%s1 + $0x10] sm:$0xf]
        %v285 = vld [vmem:[%s2] sm:$0xff]
        %v286 = vld [vmem:[%s2 + $0x8] sm:$0xff]
        %v287 = vld [vmem:[%s2 + $0x10] sm:$0xff]
        %v288 = vld [vmem:[%s2 + $0x18] sm:$0xff]
        %v289 = vld [vmem:[%s2 + $0x20] sm:$0xff]
        %291 = vset.pattern.permute.xlu0 0
        %292 = vperm.xlu0 %291, %v285
        %v293 = vpop.permute.xlu0 %292
        %296 = vset.pattern.permute.xlu0 0
        %297 = vperm.xlu0 %296, %v286
        %v298 = vpop.permute.xlu0 %297
        %301 = vset.pattern.permute.xlu0 0
        %302 = vperm.xlu0 %301, %v287
        %v303 = vpop.permute.xlu0 %302
        %306 = vset.pattern.permute.xlu0 0
        %307 = vperm.xlu0 %306, %v288
        %v308 = vpop.permute.xlu0 %307
        %311 = vset.pattern.permute.xlu0 0
        %312 = vperm.xlu0 %311, %v289
        %v313 = vpop.permute.xlu0 %312
        %v320 = vunpack.c.l.b16 %v280
        %v321 = vunpack.c.l.b16 %v281
        %v322 = vunpack.c.l.b16 %v282
        %v323 = vunpack.c.l.b16 %v283
        %v324 = vunpack.c.l.b16 %v284
        %v325 = vpack.c.b16 %v321, %v320
        %v326 = vpack.c.b16 %v323, %v322
        %v327 = vpack.c.b16 %v324, %v324
        %v330 = vunpack.c.l.b16 %v278
        %v331 = vunpack.c.l.b16 %v279
        %v332 = vpack.c.b16 %v331, %v330
        %vm334 = vcmask 130048
        %v336 = vsel %vm334, %v325, 0
        %v339 = vsel %vm334, %v326, 0
        %v342 = vsel %vm334, %v327, 0
        %344 = vmatpush.bf16.msra.mxu0 0
        %345 = vmatpush.bf16.msra.mxu0 0
        %346 = vmatpush.bf16.msra.mxu0 0
        %347 = vmatpush.bf16.msra.mxu0 0
        %348 = vmatpush.bf16.msra.mxu0 0
        %349 = vmatpush.bf16.msra.mxu0 0
        %350 = vmatpush.bf16.msra.mxu0 0
        %351 = vmatpush.bf16.msra.mxu0 %v332
        %352 = vmatmul.bf16.gmra.mxu0 %v336
        %v353 = vpop.f32.mrf.mxu0
        %v354 = vadd.f32 %v293, %v353
        %v355 = vpop.f32.mrf.mxu0
        %v356 = vadd.f32 %v298, %v355
        %357 = vmatmul.bf16.gmra.mxu0 %v339
        %v358 = vpop.f32.mrf.mxu0
        %v359 = vadd.f32 %v303, %v358
        %v360 = vpop.f32.mrf.mxu0
        %v361 = vadd.f32 %v308, %v360
        %362 = vmatmul.bf16.gmra.mxu0 %v342
        %v363 = vpop.f32.mrf.mxu0
        %v364 = vadd.f32 %v313, %v363
        %v365 = vpop.f32.mrf.mxu0
        %366 = vdwg.mxu0
        %vm367 = vcmp.gt.f32.partialorder %v354, 0.0
        %v368 = vmin.f32 %v354, 0.0
        %v369 = vmul.f32 %v368, 1.442695
        %v370 = vpow.pop %v369
        %v371 = vsub.f32 %v370, 1.0
        %v372 = vsel %vm367, %v354, %v371
        %v373 = vlaneseq
        %v374 = vand.u32 %v373, 127
        %vm375 = vcmp.gt.s32.totalorder %v374, 0
        %v376 = vsel %vm375, 1, 0
        %v377 = vcvt.s32.f32 %v376
        %vm378 = vcmp.lt.s32.totalorder %v374, 127
        %v379 = vsel %vm378, 1, 0
        %v380 = vcvt.s32.f32 %v379
        %381 = vrot.lane.b32.xlu0 %v372, 1
        %v382 = vpop.permute.xlu0 %381
        %v383 = vmul.f32 %v382, %v377
        %384 = vrot.lane.b32.xlu0 %v372, 127
        %v385 = vpop.permute.xlu0 %384
        %v386 = vmul.f32 %v385, %v380
        %v387 = vmul.f32 %v372, %v380
        %v388 = vpack.c.bf16 %v372, %v372
        %v389 = vpack.c.bf16 %v383, %v383
        %v390 = vpack.c.bf16 %v386, %v386
        %v391 = vpack.c.bf16 %v387, %v387
        %v392 = vld [vmem:[%s3] sm:$0xf]
        %s393 = scalar_lea.vmem %s3, 4
        %v394 = vld [vmem:[%s393] sm:$0xf]
        %vm395 = vcmask 64512
        %v397 = vsel %vm395, %v394, 0
        %vm399 = vcmask 1043456
        %v401 = vsel %vm399, %v388, 0
        %403 = vmatpush.bf16.msra.mxu0 0
        %404 = vmatpush.bf16.msra.mxu0 0
        %405 = vmatpush.bf16.msra.mxu0 0
        %406 = vmatpush.bf16.msra.mxu0 0
        %407 = vmatpush.bf16.msra.mxu0 0
        %408 = vmatpush.bf16.msra.mxu0 0
        %409 = vmatpush.bf16.msra.mxu0 0
        %410 = vmatpush.bf16.msra.mxu0 %v401
        %411 = vmatmul.bf16.gmra.mxu0 %v397
        %v412 = vpop.f32.mrf.mxu0
        %v413 = vadd.f32 0.0, %v412
        %v414 = vpop.f32.mrf.mxu0
        %415 = vdwg.mxu0
        %v417 = vsel %vm395, %v392, 0
        %v420 = vsel %vm399, %v389, 0
        %422 = vmatpush.bf16.msra.mxu0 0
        %423 = vmatpush.bf16.msra.mxu0 0
        %424 = vmatpush.bf16.msra.mxu0 0
        %425 = vmatpush.bf16.msra.mxu0 0
        %426 = vmatpush.bf16.msra.mxu0 0
        %427 = vmatpush.bf16.msra.mxu0 0
        %428 = vmatpush.bf16.msra.mxu0 0
        %429 = vmatpush.bf16.msra.mxu0 %v420
        %430 = vmatmul.bf16.gmra.mxu0 %v417
        %v431 = vpop.f32.mrf.mxu0
        %v432 = vadd.f32 %v413, %v431
        %v433 = vpop.f32.mrf.mxu0
        %434 = vdwg.mxu0
        %s435 = scalar_lea.vmem %s3, 8
        %v436 = vld [vmem:[%s435] sm:$0xf]
        %v438 = vsel %vm395, %v436, 0
        %v441 = vsel %vm399, %v391, 0
        %443 = vmatpush.bf16.msra.mxu0 0
        %444 = vmatpush.bf16.msra.mxu0 0
        %445 = vmatpush.bf16.msra.mxu0 0
        %446 = vmatpush.bf16.msra.mxu0 0
        %447 = vmatpush.bf16.msra.mxu0 0
        %448 = vmatpush.bf16.msra.mxu0 0
        %449 = vmatpush.bf16.msra.mxu0 0
        %450 = vmatpush.bf16.msra.mxu0 %v441
        %451 = vmatmul.bf16.gmra.mxu0 %v438
        %v452 = vpop.f32.mrf.mxu0
        %v453 = vadd.f32 0.0, %v452
        %v454 = vpop.f32.mrf.mxu0
        %455 = vdwg.mxu0
        %v456 = vadd.f32 %v432, %v453
        %v457 = vld [vmem:[%s4] sm:$0xff]
        %459 = vset.pattern.permute.xlu0 0
        %460 = vperm.xlu0 %459, %v457
        %v461 = vpop.permute.xlu0 %460
        %v463 = vadd.f32 %v456, %v461
        %s464 = scalar_lea.vmem %s3, 12
        %v465 = vld [vmem:[%s464] sm:$0xf]
        %v467 = vsel %vm399, %v390, 0
        %469 = vmatpush.bf16.msra.mxu0 0
        %470 = vmatpush.bf16.msra.mxu0 0
        %471 = vmatpush.bf16.msra.mxu0 0
        %472 = vmatpush.bf16.msra.mxu0 0
        %473 = vmatpush.bf16.msra.mxu0 0
        %474 = vmatpush.bf16.msra.mxu0 0
        %475 = vmatpush.bf16.msra.mxu0 0
        %476 = vmatpush.bf16.msra.mxu0 %v467
        %477 = vmatmul.bf16.gmra.mxu0 %v438
        %v478 = vpop.f32.mrf.mxu0
        %v479 = vadd.f32 0.0, %v478
        %v480 = vpop.f32.mrf.mxu0
        %481 = vdwg.mxu0
        %v483 = vsel %vm395, %v465, 0
        %485 = vmatpush.bf16.msra.mxu0 0
        %486 = vmatpush.bf16.msra.mxu0 0
        %487 = vmatpush.bf16.msra.mxu0 0
        %488 = vmatpush.bf16.msra.mxu0 0
        %489 = vmatpush.bf16.msra.mxu0 0
        %490 = vmatpush.bf16.msra.mxu0 0
        %491 = vmatpush.bf16.msra.mxu0 0
        %492 = vmatpush.bf16.msra.mxu0 %v401
        %493 = vmatmul.bf16.gmra.mxu0 %v483
        %v494 = vpop.f32.mrf.mxu0
        %v495 = vadd.f32 %v479, %v494
        %v496 = vpop.f32.mrf.mxu0
        %497 = vdwg.mxu0
        %v498 = vadd.f32 %v495, %v461
        %vm499 = vcmp.gt.f32.partialorder %v463, 0.0
        %v500 = vmin.f32 %v463, 0.0
        %v501 = vmul.f32 %v500, 1.442695
        %v502 = vpow.pop %v501
        %v503 = vsub.f32 %v502, 1.0
        %v504 = vsel %vm499, %v463, %v503
        %v505 = vpack.c.bf16 %v504, %v504
        %vm506 = vcmp.gt.f32.partialorder %v498, 0.0
        %v507 = vmin.f32 %v498, 0.0
        %v508 = vmul.f32 %v507, 1.442695
        %v509 = vpow.pop %v508
        %v510 = vsub.f32 %v509, 1.0
        %v511 = vsel %vm506, %v498, %v510
        %v512 = vpack.c.bf16 %v511, %v511
        %v513 = vld [vmem:[%s5] sm:$0xf]
        %v514 = vld [vmem:[%s5 + $0x4] sm:$0xf]
        %v515 = vld [vmem:[%s5 + $0x8] sm:$0xf]
        %v516 = vld [vmem:[%s5 + $0xc] sm:$0xf]
        %v517 = vld [vmem:[%s6] sm:$0xff]
        %v518 = vld [vmem:[%s6 + $0x8] sm:$0xff]
        %v519 = vld [vmem:[%s6 + $0x10] sm:$0xff]
        %v520 = vld [vmem:[%s6 + $0x18] sm:$0xff]
        %522 = vset.pattern.permute.xlu0 0
        %523 = vperm.xlu0 %522, %v517
        %v524 = vpop.permute.xlu0 %523
        %527 = vset.pattern.permute.xlu0 0
        %528 = vperm.xlu0 %527, %v518
        %v529 = vpop.permute.xlu0 %528
        %532 = vset.pattern.permute.xlu0 0
        %533 = vperm.xlu0 %532, %v519
        %v534 = vpop.permute.xlu0 %533
        %537 = vset.pattern.permute.xlu0 0
        %538 = vperm.xlu0 %537, %v520
        %v539 = vpop.permute.xlu0 %538
        %v545 = vunpack.c.l.b16 %v513
        %v546 = vunpack.c.l.b16 %v514
        %v547 = vunpack.c.l.b16 %v515
        %v548 = vunpack.c.l.b16 %v516
        %v549 = vpack.c.b16 %v546, %v545
        %v550 = vpack.c.b16 %v548, %v547
        %v552 = vsel %vm395, %v549, 0
        %v555 = vsel %vm395, %v550, 0
        %v558 = vsel %vm399, %v505, 0
        %560 = vmatpush.bf16.msra.mxu0 0
        %561 = vmatpush.bf16.msra.mxu0 0
        %562 = vmatpush.bf16.msra.mxu0 0
        %563 = vmatpush.bf16.msra.mxu0 0
        %564 = vmatpush.bf16.msra.mxu0 0
        %565 = vmatpush.bf16.msra.mxu0 0
        %566 = vmatpush.bf16.msra.mxu0 0
        %567 = vmatpush.bf16.msra.mxu0 %v558
        %568 = vmatmul.bf16.gmra.mxu0 %v552
        %v569 = vpop.f32.mrf.mxu0
        %v570 = vadd.f32 %v524, %v569
        %v571 = vpop.f32.mrf.mxu0
        %v572 = vadd.f32 %v529, %v571
        %573 = vmatmul.bf16.gmra.mxu0 %v555
        %v574 = vpop.f32.mrf.mxu0
        %v575 = vadd.f32 %v534, %v574
        %v576 = vpop.f32.mrf.mxu0
        %v577 = vadd.f32 %v539, %v576
        %578 = vdwg.mxu0
        %v580 = vsel %vm399, %v512, 0
        %582 = vmatpush.bf16.msra.mxu0 0
        %583 = vmatpush.bf16.msra.mxu0 0
        %584 = vmatpush.bf16.msra.mxu0 0
        %585 = vmatpush.bf16.msra.mxu0 0
        %586 = vmatpush.bf16.msra.mxu0 0
        %587 = vmatpush.bf16.msra.mxu0 0
        %588 = vmatpush.bf16.msra.mxu0 0
        %589 = vmatpush.bf16.msra.mxu0 %v580
        %590 = vmatmul.bf16.gmra.mxu0 %v552
        %v591 = vpop.f32.mrf.mxu0
        %v592 = vadd.f32 %v524, %v591
        %v593 = vpop.f32.mrf.mxu0
        %v594 = vadd.f32 %v529, %v593
        %595 = vmatmul.bf16.gmra.mxu0 %v555
        %v596 = vpop.f32.mrf.mxu0
        %v597 = vadd.f32 %v534, %v596
        %v598 = vpop.f32.mrf.mxu0
        %v599 = vadd.f32 %v539, %v598
        %600 = vdwg.mxu0
        %v601 = vadd.f32 %v570, %v356
        %v602 = vadd.f32 %v572, %v359
        %v603 = vadd.f32 %v575, %v361
        %v604 = vadd.f32 %v577, %v364
        %vm605 = vcmp.gt.f32.partialorder %v601, 0.0
        %vm606 = vcmp.gt.f32.partialorder %v602, 0.0
        %vm607 = vcmp.gt.f32.partialorder %v603, 0.0
        %vm608 = vcmp.gt.f32.partialorder %v604, 0.0
        %v609 = vmin.f32 %v601, 0.0
        %v610 = vmin.f32 %v602, 0.0
        %v611 = vmin.f32 %v603, 0.0
        %v612 = vmin.f32 %v604, 0.0
        %v613 = vmul.f32 %v609, 1.442695
        %v614 = vpow.pop %v613
        %v615 = vmul.f32 %v610, 1.442695
        %v616 = vpow.pop %v615
        %v617 = vmul.f32 %v611, 1.442695
        %v618 = vpow.pop %v617
        %v619 = vmul.f32 %v612, 1.442695
        %v620 = vpow.pop %v619
        %v621 = vsub.f32 %v614, 1.0
        %v622 = vsub.f32 %v616, 1.0
        %v623 = vsub.f32 %v618, 1.0
        %v624 = vsub.f32 %v620, 1.0
        %v625 = vsel %vm605, %v601, %v621
        %v626 = vsel %vm606, %v602, %v622
        %v627 = vsel %vm607, %v603, %v623
        %v628 = vsel %vm608, %v604, %v624
        %629 = vst [vmem:[%s271] sm:$0xff] %v625
        %630 = vst [vmem:[%s271 + $0x10] sm:$0xff] %v626
        %631 = vst [vmem:[%s271 + $0x20] sm:$0xff] %v627
        %632 = vst [vmem:[%s271 + $0x30] sm:$0xff] %v628
        %v633 = vadd.f32 %v592, %v356
        %v634 = vadd.f32 %v594, %v359
        %v635 = vadd.f32 %v597, %v361
        %v636 = vadd.f32 %v599, %v364
        %vm637 = vcmp.gt.f32.partialorder %v633, 0.0
        %vm638 = vcmp.gt.f32.partialorder %v634, 0.0
        %vm639 = vcmp.gt.f32.partialorder %v635, 0.0
        %vm640 = vcmp.gt.f32.partialorder %v636, 0.0
        %v641 = vmin.f32 %v633, 0.0
        %v642 = vmin.f32 %v634, 0.0
        %v643 = vmin.f32 %v635, 0.0
        %v644 = vmin.f32 %v636, 0.0
        %v645 = vmul.f32 %v641, 1.442695
        %v646 = vpow.pop %v645
        %v647 = vmul.f32 %v642, 1.442695
        %v648 = vpow.pop %v647
        %v649 = vmul.f32 %v643, 1.442695
        %v650 = vpow.pop %v649
        %v651 = vmul.f32 %v644, 1.442695
        %v652 = vpow.pop %v651
        %v653 = vsub.f32 %v646, 1.0
        %v654 = vsub.f32 %v648, 1.0
        %v655 = vsub.f32 %v650, 1.0
        %v656 = vsub.f32 %v652, 1.0
        %v657 = vsel %vm637, %v633, %v653
        %v658 = vsel %vm638, %v634, %v654
        %v659 = vsel %vm639, %v635, %v655
        %v660 = vsel %vm640, %v636, %v656
        %661 = vst [vmem:[%s271 + $0x8] sm:$0xff] %v657
        %662 = vst [vmem:[%s271 + $0x18] sm:$0xff] %v658
        %663 = vst [vmem:[%s271 + $0x28] sm:$0xff] %v659
        %664 = vst [vmem:[%s271 + $0x38] sm:$0xff] %v660
        %s665 = sand.u32 %s181, 1
        %s666 = scalar_lea.sflag [#allocation3], %s665
        %s667 = sand.u32 %s181, 1
        %s668 = smul.addr %s667, 64
        %s669 = scalar_lea.vmem [#allocation2], %s668
        // Predicated region
        $region49: #{tpu_custom_call.1} parent=47 // pred_check
          %p670 = pneg %p191
        $region50: #{tpu_custom_call.1} parent=47 // pred_check_branch
          %672 = sbr.rel (%p670) target = $region52
        $region51: #{tpu_custom_call.1} parent=47 // pred_region
          %674 = vsyncadd %s666, 0
          %s675 = smul.addr %s21, 8
          %s676 = smul.addr %s675, 8
          %s677 = scalar_lea.hbm %s7, %s676
          %s678 = sshll.u32 %s669, 4
          %s679 = int_to_ptr.vmem [resolvable:$true] %s678
          %s680 = sshll.u32 %s677, 4
          %s681 = int_to_ptr.hbm [resolvable:$true] %s680
          %686 = dma.vmem_to_hbm [thread:$0]  %s679, 1024, %s681, %s666, 256, 256, 16
        $region52: #{tpu_custom_call.1} parent=47 // pred_fallthru
          _
      $region48: #{tpu_custom_call.1} parent=5 // pred_fallthru
        _
      %p687 = scmp.le.s32.totalorder 2, %s16
      // Predicated region
      $region53: #{tpu_custom_call.1} parent=5 // pred_check
        %p688 = pneg %p687
      $region54: #{tpu_custom_call.1} parent=5 // pred_check_branch
        %690 = sbr.rel (%p688) target = $region56
      $region55: #{tpu_custom_call.1} parent=5 // pred_region
        %s691 = ssub.s32 %s16, 2
        // Predicated region
        $region57: #{tpu_custom_call.1} parent=55 // pred_check
          %p692 = pneg %p197
        $region58: #{tpu_custom_call.1} parent=55 // pred_check_branch
          %694 = sbr.rel (%p692) target = $region60
        $region59: #{tpu_custom_call.1} parent=55 // pred_region
          %s695 = sand.u32 %s182, 1
          %s696 = scalar_lea.sflag [#allocation3], %s695
          %s697 = sand.u32 %s182, 1
          %s698 = smul.addr %s697, 64
          %s699 = scalar_lea.vmem [#allocation2], %s698
          %701 = dma.done %s696, 1024
        $region60: #{tpu_custom_call.1} parent=55 // pred_fallthru
          _
      $region56: #{tpu_custom_call.1} parent=5 // pred_fallthru
        _
    $region6: #{tpu_custom_call.1} parent=1 // loop_footer
      %s20 = sadd.s32 1, %s16
    $region7: #{tpu_custom_call.1} parent=1 // loop_footer_branch
      %15 = sbr.rel target = $region3
    $region8: #{tpu_custom_call.1} parent=1 // loop_exit
      _
    %702 = vsyncpa [#allocation3], 1
    %s703 = scalar_lea.sflag [#allocation3], 1
    %704 = vsyncpa %s703, 1

</llo_original>
